<compile_context>
chip_gen: v5e
topology: v5e:2x2
jax: 0.10.0
libtpu: 0.0.40
codegen_flags: <defaults>
</compile_context>

<pallas_src>
import functools

import jax
import jax.numpy as jnp
from jax import lax
from jax.experimental import pallas as pl
from jax.experimental.pallas import tpu as pltpu


def _antideriv_tanh(x):
    # antiderivTanh(x) = |x| + log(1 + exp(-2|x|))   (numerically stable form)
    ax = jnp.abs(x)
    return ax + jnp.log1p(jnp.exp(-2.0 * ax))


def phi_kernel(x_ref, w0_ref, b0_ref, wh_ref, bh_ref, ww_ref, cw_ref, cb_ref,
               syma_ref, o_ref, *, h, n_hidden):
    """One sample-tile of Phi. x_ref is [d+1, TILE_N] (samples on lanes)."""
    x = x_ref[...]                                         # f32 [d+1, TN]
    mm_dtype = w0_ref.dtype                                # bf16 (or f32) MXU operands

    # ---- ResNN opening layer: [m, TN] ----
    opening = jnp.dot(w0_ref[...], x.astype(mm_dtype),
                      preferred_element_type=jnp.float32) + b0_ref[...]
    u = _antideriv_tanh(opening)                           # f32 [m, TN]

    # ---- residual hidden layers (MXU matmuls, f32 accumulation) ----
    def layer(i, u):
        lin = jnp.dot(wh_ref[i], u.astype(mm_dtype),
                      preferred_element_type=jnp.float32) + bh_ref[i]
        return u + h * _antideriv_tanh(lin)

    if n_hidden <= 4:
        # short chain: static unroll is fine
        for i in range(n_hidden):
            u = layer(i, u)
    else:
        # long chain: bound vreg live ranges while keeping LLO visibility
        u = lax.fori_loop(0, n_hidden, layer, u, unroll=True)

    # ---- w' * N(x): width-1 output -> VPU mul + sublane reduce, not MXU ----
    wN = jnp.sum(ww_ref[...] * u, axis=0, keepdims=True)               # [1, TN]

    # ---- 0.5 * x' (A'A) x  (symA precomputed in wrapper) ----
    xA = jnp.dot(syma_ref[...], x, preferred_element_type=jnp.float32)  # [d+1, TN]
    quad = 0.5 * jnp.sum(xA * x, axis=0, keepdims=True)                 # [1, TN]

    # ---- c(x): width-1 output -> VPU mul + sublane reduce ----
    cx = jnp.sum(cw_ref[...] * x, axis=0, keepdims=True) + cb_ref[...]  # [1, TN]

    o_ref[...] = wN + quad + cx


def phi_forward(x, params, nTh, *, tile_n=2048, mm_dtype=jnp.bfloat16):
    """Wrapper: layout plumbing (transpose/pad/cast) + tiled pallas_call."""
    w0, b0, wh, bh, ww, cw, cb, A = params
    h = 1.0 / (nTh - 1)
    nex, dp1 = x.shape
    m = w0.shape[0]
    n_hidden = nTh - 1

    # grid-invariant work hoisted out of the kernel
    symA = jnp.dot(A.T, A).astype(jnp.float32)             # [d+1, d+1]

    # lane-dense layout: samples on the 128-lane axis, padded to the tile size
    tile_n = max(128, (min(tile_n, pl.cdiv(nex, 128) * 128) // 128) * 128)
    nex_pad = pl.cdiv(nex, tile_n) * tile_n
    xT = jnp.pad(x.astype(jnp.float32).T, ((0, 0), (0, nex_pad - nex)))

    args = (
        xT,                                                 # [d+1, nex_pad]
        w0.astype(mm_dtype),                                # [m, d+1]
        b0.reshape(m, 1).astype(jnp.float32),               # [m, 1]
        wh.astype(mm_dtype),                                # [nTh-1, m, m]
        bh.reshape(n_hidden, m, 1).astype(jnp.float32),     # [nTh-1, m, 1]
        ww.reshape(m, 1).astype(jnp.float32),               # [m, 1]
        cw.reshape(dp1, 1).astype(jnp.float32),             # [d+1, 1]
        cb.reshape(1, 1).astype(jnp.float32),               # [1, 1]
        symA,                                               # [d+1, d+1]
    )

    def resident(shape):
        return pl.BlockSpec(shape, lambda i: (0,) * len(shape))

    in_specs = [
        pl.BlockSpec((dp1, tile_n), lambda i: (0, i)),      # x tile (pipelined)
        resident((m, dp1)),
        resident((m, 1)),
        resident((n_hidden, m, m)),
        resident((n_hidden, m, 1)),
        resident((m, 1)),
        resident((dp1, 1)),
        resident((1, 1)),
        resident((dp1, dp1)),
    ]
    out_specs = pl.BlockSpec((1, tile_n), lambda i: (0, i))
    grid = (nex_pad // tile_n,)

    weight_bytes = sum(int(a.size) * a.dtype.itemsize for a in args[1:])
    cost = pl.CostEstimate(
        flops=int(nex_pad * (2 * m * dp1 + n_hidden * 2 * m * m
                             + 2 * dp1 * dp1 + 2 * m + 2 * dp1)),
        transcendentals=int(2 * nex_pad * m * (1 + n_hidden)),
        bytes_accessed=int(xT.size * 4 + nex_pad * 4 + weight_bytes),
    )

    kernel = functools.partial(phi_kernel, h=h, n_hidden=n_hidden)
    out = pl.pallas_call(
        kernel,
        out_shape=jax.ShapeDtypeStruct((1, nex_pad), jnp.float32),
        grid_spec=pltpu.PrefetchScalarGridSpec(
            num_scalar_prefetch=0,
            grid=grid,
            in_specs=in_specs,
            out_specs=out_specs,
        ),
        compiler_params=pltpu.CompilerParams(
            dimension_semantics=("parallel",),
            vmem_limit_bytes=48 * 1024 * 1024,
        ),
        cost_estimate=cost,
    )(*args)

    return out[0, :nex].reshape(nex, 1)


# ---------------- parameter init (deterministic, mirrors __init__) ----------------
def init_phi_params(key, nTh, m, d, r=10):
    r = min(r, d + 1)
    k0, k1, k2, k3, kA = jax.random.split(key, 5)

    # ResNN layer 0: Linear(d+1 -> m)
    bound0 = 1.0 / jnp.sqrt(d + 1.0)
    w0 = jax.random.uniform(k0, (m, d + 1), jnp.float32, -bound0, bound0)
    b0 = jax.random.uniform(k1, (m,), jnp.float32, -bound0, bound0)

    # ResNN layers 1..nTh-1: Linear(m -> m) (deepcopies of layer 1 -> identical)
    bound1 = 1.0 / jnp.sqrt(float(m))
    wh1 = jax.random.uniform(k2, (m, m), jnp.float32, -bound1, bound1)
    bh1 = jax.random.uniform(k3, (m,), jnp.float32, -bound1, bound1)
    wh = jnp.broadcast_to(wh1, (nTh - 1, m, m)).copy()
    bh = jnp.broadcast_to(bh1, (nTh - 1, m)).copy()

    # w: Linear(m,1,bias=False), weight explicitly set to ones
    ww = jnp.ones((1, m), jnp.float32)
    # c: Linear(d+1,1), weight and bias explicitly set to zeros
    cw = jnp.zeros((1, d + 1), jnp.float32)
    cb = jnp.zeros((1,), jnp.float32)
    # A: xavier_uniform_ on (r, d+1)
    gain = jnp.sqrt(6.0 / (r + d + 1.0))
    A = jax.random.uniform(kA, (r, d + 1), jnp.float32, -gain, gain)

    return (w0, b0, wh, bh, ww, cw, cb, A)


# ---------------- pure-JAX reference for verification ----------------
def phi_reference(x, params, nTh):
    w0, b0, wh, bh, ww, cw, cb, A = params
    h = 1.0 / (nTh - 1)
    u = _antideriv_tanh(x @ w0.T + b0)
    for i in range(nTh - 1):
        u = u + h * _antideriv_tanh(u @ wh[i].T + bh[i])
    wN = u @ ww.T
    symA = A.T @ A
    quad = 0.5 * jnp.sum((x @ symA) * x, axis=1, keepdims=True)
    cx = x @ cw.T + cb
    return wN + quad + cx


# TODO(synk): Phi.trHess (gradient / Hessian-trace) is a separate method, not the
# forward pass, and is not implemented here.

if __name__ == "__main__":
    # Small shapes consistent with the module's forward: x is [nex, d+1].
    nTh, m, d, r = 3, 32, 2, 10
    nex = 200   # not a multiple of the tile -> exercises remainder padding

    key = jax.random.PRNGKey(0)
    kp, kx = jax.random.split(key)
    params = init_phi_params(kp, nTh, m, d, r)
    x = jax.random.normal(kx, (nex, d + 1), jnp.float32)

    ref = phi_reference(x, params, nTh)

    # exact path (f32 MXU operands), 2 grid steps with tile_n=128
    out_f32 = jax.block_until_ready(
        phi_forward(x, params, nTh, tile_n=128, mm_dtype=jnp.float32))
    assert out_f32.shape == (nex, 1)
    assert jnp.allclose(out_f32, ref, rtol=1e-4, atol=1e-3), (out_f32, ref)

    # fast path (bf16 MXU operands, f32 accumulation) -> looser tolerance
    out_bf16 = jax.block_until_ready(
        phi_forward(x, params, nTh, tile_n=128, mm_dtype=jnp.bfloat16))
    assert out_bf16.shape == (nex, 1)
    assert jnp.allclose(out_bf16, ref, rtol=2e-2, atol=5e-2), (out_bf16, ref)

    print("KERNEL_OK")
</pallas_src>

<mosaic_0001>
module attributes {stable_mosaic.version = 11 : i64} {
  func.func @phi_kernel(%arg0: i32, %arg1: memref<3x128xf32, #tpu.memory_space<vmem>>, %arg2: memref<32x3xf32, #tpu.memory_space<vmem>>, %arg3: memref<32x1xf32, #tpu.memory_space<vmem>>, %arg4: memref<2x32x32xf32, #tpu.memory_space<vmem>>, %arg5: memref<2x32x1xf32, #tpu.memory_space<vmem>>, %arg6: memref<32x1xf32, #tpu.memory_space<vmem>>, %arg7: memref<3x1xf32, #tpu.memory_space<vmem>>, %arg8: memref<1x1xf32, #tpu.memory_space<vmem>>, %arg9: memref<3x3xf32, #tpu.memory_space<vmem>>, %arg10: memref<1x128xf32, #tpu.memory_space<vmem>>) attributes {dimension_semantics = [#tpu.dimension_semantics<parallel>], iteration_bounds = array<i64: 2>, scalar_prefetch = 0 : i64, scratch_operands = 0 : i64, tpu.core_type = #tpu.core_type<tc>, window_params = [{transform_indices = @transform_0, window_bounds = array<i64: 3, 128>}, {pipeline_mode = #tpu.pipeline_mode<synchronous>, transform_indices = @transform_1, window_bounds = array<i64: 32, 3>}, {pipeline_mode = #tpu.pipeline_mode<synchronous>, transform_indices = @transform_2, window_bounds = array<i64: 32, 1>}, {pipeline_mode = #tpu.pipeline_mode<synchronous>, transform_indices = @transform_3, window_bounds = array<i64: 2, 32, 32>}, {pipeline_mode = #tpu.pipeline_mode<synchronous>, transform_indices = @transform_4, window_bounds = array<i64: 2, 32, 1>}, {pipeline_mode = #tpu.pipeline_mode<synchronous>, transform_indices = @transform_5, window_bounds = array<i64: 32, 1>}, {pipeline_mode = #tpu.pipeline_mode<synchronous>, transform_indices = @transform_6, window_bounds = array<i64: 3, 1>}, {pipeline_mode = #tpu.pipeline_mode<synchronous>, transform_indices = @transform_7, window_bounds = array<i64: 1, 1>}, {pipeline_mode = #tpu.pipeline_mode<synchronous>, transform_indices = @transform_8, window_bounds = array<i64: 3, 3>}, {transform_indices = @transform_9, window_bounds = array<i64: 1, 128>}]} {
    %c0 = arith.constant 0 : index
    %c0_0 = arith.constant 0 : index
    %0 = vector.load %arg1[%c0, %c0_0] : memref<3x128xf32, #tpu.memory_space<vmem>>, vector<3x128xf32>
    %c0_1 = arith.constant 0 : index
    %c0_2 = arith.constant 0 : index
    %1 = vector.load %arg2[%c0_1, %c0_2] : memref<32x3xf32, #tpu.memory_space<vmem>>, vector<32x3xf32>
    %cst = arith.constant dense<0.000000e+00> : vector<32x128xf32>
    %2 = tpu.matmul %1, %0, %cst {dimension_numbers = #tpu.dot_dimension_numbers<[1], [0], [0], [1], [0, 0, 1, 1], [], []>} : vector<32x3xf32>, vector<3x128xf32>, vector<32x128xf32> -> vector<32x128xf32>
    %c0_3 = arith.constant 0 : index
    %c0_4 = arith.constant 0 : index
    %3 = vector.load %arg3[%c0_3, %c0_4] : memref<32x1xf32, #tpu.memory_space<vmem>>, vector<32x1xf32>
    %4 = vector.broadcast %3 : vector<32x1xf32> to vector<32x128xf32>
    %5 = arith.addf %2, %4 : vector<32x128xf32>
    %6 = math.absf %5 : vector<32x128xf32>
    %cst_5 = arith.constant -2.000000e+00 : f32
    %7 = vector.broadcast %cst_5 : f32 to vector<32x128xf32>
    %8 = arith.mulf %7, %6 : vector<32x128xf32>
    %9 = math.exp %8 : vector<32x128xf32>
    %10 = math.log1p %9 : vector<32x128xf32>
    %11 = arith.addf %6, %10 : vector<32x128xf32>
    %c0_6 = arith.constant 0 : index
    %c0_7 = arith.constant 0 : index
    %c0_8 = arith.constant 0 : index
    %12 = vector.load %arg4[%c0_6, %c0_7, %c0_8] : memref<2x32x32xf32, #tpu.memory_space<vmem>>, vector<1x32x32xf32>
    %13 = vector.shape_cast %12 : vector<1x32x32xf32> to vector<32x32xf32>
    %cst_9 = arith.constant dense<0.000000e+00> : vector<32x128xf32>
    %14 = tpu.matmul %13, %11, %cst_9 {dimension_numbers = #tpu.dot_dimension_numbers<[1], [0], [0], [1], [0, 0, 1, 1], [], []>} : vector<32x32xf32>, vector<32x128xf32>, vector<32x128xf32> -> vector<32x128xf32>
    %c0_10 = arith.constant 0 : index
    %c0_11 = arith.constant 0 : index
    %c0_12 = arith.constant 0 : index
    %15 = vector.load %arg5[%c0_10, %c0_11, %c0_12] : memref<2x32x1xf32, #tpu.memory_space<vmem>>, vector<1x32x1xf32>
    %16 = vector.shape_cast %15 : vector<1x32x1xf32> to vector<32x1xf32>
    %17 = vector.broadcast %16 : vector<32x1xf32> to vector<32x128xf32>
    %18 = arith.addf %14, %17 : vector<32x128xf32>
    %19 = math.absf %18 : vector<32x128xf32>
    %cst_13 = arith.constant -2.000000e+00 : f32
    %20 = vector.broadcast %cst_13 : f32 to vector<32x128xf32>
    %21 = arith.mulf %20, %19 : vector<32x128xf32>
    %22 = math.exp %21 : vector<32x128xf32>
    %23 = math.log1p %22 : vector<32x128xf32>
    %24 = arith.addf %19, %23 : vector<32x128xf32>
    %cst_14 = arith.constant 5.000000e-01 : f32
    %25 = vector.broadcast %cst_14 : f32 to vector<32x128xf32>
    %26 = arith.mulf %25, %24 : vector<32x128xf32>
    %27 = arith.addf %11, %26 : vector<32x128xf32>
    %c1 = arith.constant 1 : index
    %c0_15 = arith.constant 0 : index
    %c0_16 = arith.constant 0 : index
    %28 = vector.load %arg4[%c1, %c0_15, %c0_16] : memref<2x32x32xf32, #tpu.memory_space<vmem>>, vector<1x32x32xf32>
    %29 = vector.shape_cast %28 : vector<1x32x32xf32> to vector<32x32xf32>
    %cst_17 = arith.constant dense<0.000000e+00> : vector<32x128xf32>
    %30 = tpu.matmul %29, %27, %cst_17 {dimension_numbers = #tpu.dot_dimension_numbers<[1], [0], [0], [1], [0, 0, 1, 1], [], []>} : vector<32x32xf32>, vector<32x128xf32>, vector<32x128xf32> -> vector<32x128xf32>
    %c1_18 = arith.constant 1 : index
    %c0_19 = arith.constant 0 : index
    %c0_20 = arith.constant 0 : index
    %31 = vector.load %arg5[%c1_18, %c0_19, %c0_20] : memref<2x32x1xf32, #tpu.memory_space<vmem>>, vector<1x32x1xf32>
    %32 = vector.shape_cast %31 : vector<1x32x1xf32> to vector<32x1xf32>
    %33 = vector.broadcast %32 : vector<32x1xf32> to vector<32x128xf32>
    %34 = arith.addf %30, %33 : vector<32x128xf32>
    %35 = math.absf %34 : vector<32x128xf32>
    %cst_21 = arith.constant -2.000000e+00 : f32
    %36 = vector.broadcast %cst_21 : f32 to vector<32x128xf32>
    %37 = arith.mulf %36, %35 : vector<32x128xf32>
    %38 = math.exp %37 : vector<32x128xf32>
    %39 = math.log1p %38 : vector<32x128xf32>
    %40 = arith.addf %35, %39 : vector<32x128xf32>
    %cst_22 = arith.constant 5.000000e-01 : f32
    %41 = vector.broadcast %cst_22 : f32 to vector<32x128xf32>
    %42 = arith.mulf %41, %40 : vector<32x128xf32>
    %43 = arith.addf %27, %42 : vector<32x128xf32>
    %c0_23 = arith.constant 0 : index
    %c0_24 = arith.constant 0 : index
    %44 = vector.load %arg6[%c0_23, %c0_24] : memref<32x1xf32, #tpu.memory_space<vmem>>, vector<32x1xf32>
    %45 = vector.broadcast %44 : vector<32x1xf32> to vector<32x128xf32>
    %46 = arith.mulf %45, %43 : vector<32x128xf32>
    %cst_25 = arith.constant dense<0.000000e+00> : vector<128xf32>
    %47 = vector.multi_reduction <add>, %46, %cst_25 [0] : vector<32x128xf32> to vector<128xf32>
    %48 = vector.shape_cast %47 : vector<128xf32> to vector<1x128xf32>
    %c0_26 = arith.constant 0 : index
    %c0_27 = arith.constant 0 : index
    %49 = vector.load %arg9[%c0_26, %c0_27] : memref<3x3xf32, #tpu.memory_space<vmem>>, vector<3x3xf32>
    %cst_28 = arith.constant dense<0.000000e+00> : vector<3x128xf32>
    %50 = tpu.matmul %49, %0, %cst_28 {dimension_numbers = #tpu.dot_dimension_numbers<[1], [0], [0], [1], [0, 0, 1, 1], [], []>} : vector<3x3xf32>, vector<3x128xf32>, vector<3x128xf32> -> vector<3x128xf32>
    %51 = arith.mulf %50, %0 : vector<3x128xf32>
    %cst_29 = arith.constant dense<0.000000e+00> : vector<128xf32>
    %52 = vector.multi_reduction <add>, %51, %cst_29 [0] : vector<3x128xf32> to vector<128xf32>
    %53 = vector.shape_cast %52 : vector<128xf32> to vector<1x128xf32>
    %cst_30 = arith.constant 5.000000e-01 : f32
    %54 = vector.broadcast %cst_30 : f32 to vector<1x128xf32>
    %55 = arith.mulf %54, %53 : vector<1x128xf32>
    %c0_31 = arith.constant 0 : index
    %c0_32 = arith.constant 0 : index
    %56 = vector.load %arg7[%c0_31, %c0_32] : memref<3x1xf32, #tpu.memory_space<vmem>>, vector<3x1xf32>
    %57 = vector.broadcast %56 : vector<3x1xf32> to vector<3x128xf32>
    %58 = arith.mulf %57, %0 : vector<3x128xf32>
    %cst_33 = arith.constant dense<0.000000e+00> : vector<128xf32>
    %59 = vector.multi_reduction <add>, %58, %cst_33 [0] : vector<3x128xf32> to vector<128xf32>
    %60 = vector.shape_cast %59 : vector<128xf32> to vector<1x128xf32>
    %c0_34 = arith.constant 0 : index
    %c0_35 = arith.constant 0 : index
    %61 = vector.load %arg8[%c0_34, %c0_35] : memref<1x1xf32, #tpu.memory_space<vmem>>, vector<1x1xf32>
    %62 = vector.broadcast %61 : vector<1x1xf32> to vector<1x128xf32>
    %63 = arith.addf %60, %62 : vector<1x128xf32>
    %64 = arith.addf %48, %55 : vector<1x128xf32>
    %65 = arith.addf %64, %63 : vector<1x128xf32>
    %c0_36 = arith.constant 0 : index
    %c0_37 = arith.constant 0 : index
    %66 = vector.load %arg10[%c0_36, %c0_37] : memref<1x128xf32, #tpu.memory_space<vmem>>, vector<1x128xf32>
    tpu.vector_store %arg10[%c0_36, %c0_37], %65 {strides = array<i32>} : memref<1x128xf32, #tpu.memory_space<vmem>>, vector<1x128xf32>,
    return
  }
  func.func @transform_0(%arg0: i32) -> (i32, i32) {
    %c0_i32 = arith.constant 0 : i32
    %c0_i32_0 = arith.constant 0 : i32
    return %c0_i32, %arg0 : i32, i32
  }
  func.func @transform_1(%arg0: i32) -> (i32, i32) {
    %c0_i32 = arith.constant 0 : i32
    %c0_i32_0 = arith.constant 0 : i32
    %c0_i32_1 = arith.constant 0 : i32
    return %c0_i32, %c0_i32_0 : i32, i32
  }
  func.func @transform_2(%arg0: i32) -> (i32, i32) {
    %c0_i32 = arith.constant 0 : i32
    %c0_i32_0 = arith.constant 0 : i32
    %c0_i32_1 = arith.constant 0 : i32
    return %c0_i32, %c0_i32_0 : i32, i32
  }
  func.func @transform_3(%arg0: i32) -> (i32, i32, i32) {
    %c0_i32 = arith.constant 0 : i32
    %c0_i32_0 = arith.constant 0 : i32
    %c0_i32_1 = arith.constant 0 : i32
    %c0_i32_2 = arith.constant 0 : i32
    return %c0_i32, %c0_i32_0, %c0_i32_1 : i32, i32, i32
  }
  func.func @transform_4(%arg0: i32) -> (i32, i32, i32) {
    %c0_i32 = arith.constant 0 : i32
    %c0_i32_0 = arith.constant 0 : i32
    %c0_i32_1 = arith.constant 0 : i32
    %c0_i32_2 = arith.constant 0 : i32
    return %c0_i32, %c0_i32_0, %c0_i32_1 : i32, i32, i32
  }
  func.func @transform_5(%arg0: i32) -> (i32, i32) {
    %c0_i32 = arith.constant 0 : i32
    %c0_i32_0 = arith.constant 0 : i32
    %c0_i32_1 = arith.constant 0 : i32
    return %c0_i32, %c0_i32_0 : i32, i32
  }
  func.func @transform_6(%arg0: i32) -> (i32, i32) {
    %c0_i32 = arith.constant 0 : i32
    %c0_i32_0 = arith.constant 0 : i32
    %c0_i32_1 = arith.constant 0 : i32
    return %c0_i32, %c0_i32_0 : i32, i32
  }
  func.func @transform_7(%arg0: i32) -> (i32, i32) {
    %c0_i32 = arith.constant 0 : i32
    %c0_i32_0 = arith.constant 0 : i32
    %c0_i32_1 = arith.constant 0 : i32
    return %c0_i32, %c0_i32_0 : i32, i32
  }
  func.func @transform_8(%arg0: i32) -> (i32, i32) {
    %c0_i32 = arith.constant 0 : i32
    %c0_i32_0 = arith.constant 0 : i32
    %c0_i32_1 = arith.constant 0 : i32
    return %c0_i32, %c0_i32_0 : i32, i32
  }
  func.func @transform_9(%arg0: i32) -> (i32, i32) {
    %c0_i32 = arith.constant 0 : i32
    %c0_i32_0 = arith.constant 0 : i32
    return %c0_i32, %arg0 : i32, i32
  }
}

</mosaic_0001>

<llo_original>
// kernel: tpu_custom_call.1
$region0: #{tpu_custom_call.1}
  #allocation0 [shape = 'u32[]', space=smem, size = 0x4, offset = 0x4, fixed_abs, tag = 'smem constant byte address 0x4 - core index']
  #allocation1 [shape = 'u32[72,128]{1,0:T(1,128)}', space=vmem, size = 0x9000, scoped, tag = 'internal scratch']
  #allocation2 [shape = 'f32[1,1]{1,0:T(1,128)S(1)}', space=vmem, size = 0x200, scoped, tag = 'scoped memory for tpu_custom_call.1']
  %s0 = inlined_call_operand.vmem [shape: f32[3,256], index: 0, kind: input, shape index: {}]
  %s1 = inlined_call_operand.vmem [shape: f32[32,3], index: 1, kind: input, shape index: {}]
  %s2 = inlined_call_operand.vmem [shape: f32[32,1], index: 2, kind: input, shape index: {}]
  %s3 = inlined_call_operand.vmem [shape: f32[2,32,32], index: 3, kind: input, shape index: {}]
  %s4 = inlined_call_operand.vmem [shape: f32[2,32,1], index: 4, kind: input, shape index: {}]
  %s5 = inlined_call_operand.vmem [shape: f32[32,1], index: 5, kind: input, shape index: {}]
  %s6 = inlined_call_operand.vmem [shape: f32[3,1], index: 6, kind: input, shape index: {}]
  %s7 = inlined_call_operand.<no memory space> [shape: f32[1,1], index: 7, kind: input, shape index: {}]
  %s8 = inlined_call_operand.vmem [shape: f32[3,3], index: 8, kind: input, shape index: {}]
  %s9 = inlined_call_operand.hbm [shape: f32[1,256], index: 9, kind: output, shape index: {}]
  %s10 = sld [smem:[#allocation0]]
  $region69: #{tpu_custom_call.1} parent=0
    _
  %s12 = ssub.s32 1, %s10
  %s13 = scalar_select 0, %s12, %s10
  %v14 = vstv %s7
  %15 = vst [vmem:[#allocation2] sm:$0x1] %v14
  $region1: #{tpu_custom_call.1} parent=0
    #allocation3 [shape = 'u8[1024]{0}', space=vmem, size = 0x400, scoped, tag = 'output window, operand 0']
    #allocation4 [shape = 's32[2]{0}', space=sflag, size = 0x8, scoped, tag = 'scoped memory for tpu_custom_call.1']
    %16 = vsyncpa [#allocation4], 0
    %s17 = scalar_lea.sflag [#allocation4], 1
    %18 = vsyncpa %s17, 0
    loop: start=0, step=1, limit=4
    $region2: #{tpu_custom_call.1} parent=1 // loop_pre_header
      _
    $region3: #{tpu_custom_call.1} parent=1 // loop_header
      %s20 = sphi 0, %s24
      %p21 = scmp.ge.s32.totalorder %s20, 4
      %s30 = sphi 0, %s32
      %s33 = sphi 0, %s30
      %s34 = sphi 0, %s33
      %s50 = sphi 0, %s34
      %s54 = sphi 0, %s54
      %s56 = sphi 0, %s54
      %s57 = sphi 0, %s56
      %s71 = sphi 0, %s57
      %s75 = sphi 0, %s75
      %s77 = sphi 0, %s75
      %s78 = sphi 0, %s77
      %s92 = sphi 0, %s78
      %s96 = sphi 0, %s96
      %s98 = sphi 0, %s96
      %s99 = sphi 0, %s98
      %s113 = sphi 0, %s99
      %s117 = sphi 0, %s117
      %s119 = sphi 0, %s117
      %s120 = sphi 0, %s119
      %s134 = sphi 0, %s120
      %s138 = sphi 0, %s138
      %s140 = sphi 0, %s138
      %s141 = sphi 0, %s140
      %s155 = sphi 0, %s141
      %s159 = sphi 0, %s159
      %s161 = sphi 0, %s159
      %s162 = sphi 0, %s161
      %s176 = sphi 0, %s162
      %s180 = sphi 0, %s180
      %s182 = sphi 0, %s180
      %s183 = sphi 0, %s182
      %s197 = sphi 0, %s183
      %s201 = sphi 0, %s201
      %s203 = sphi 0, %s201
      %s204 = sphi 0, %s203
      %s218 = sphi 0, %s204
      %s224 = sphi 0, %s226
      %s227 = sphi 0, %s224
      %s228 = sphi 0, %s227
      %s244 = sphi 0, %s228
    $region4: #{tpu_custom_call.1} parent=1 // loop_header_branch
      %23 = sbr.rel (%p21) target = $region8
    $region5: #{tpu_custom_call.1} parent=1 // loop_body
      %s25 = ssub.s32 %s20, 1
      %s26 = ssub.s32 %s20, 2
      %s27 = sadd.s32 %s20, 1
      %s28 = ssub.s32 %s20, %s27
      %p29 = scmp.eq.s32.totalorder %s28, 0
      %s31 = sadd.s32 %s30, 1
      %s32 = scalar_select %p29, %s30, %s31
      %p35 = pneg %p29
      %p36 = scmp.eq.s32.totalorder %s20, 1
      %p37 = por %p35, %p36
      %p38 = scmp.ne.s32.totalorder %s30, %s33
      %p39 = scmp.eq.s32.totalorder %s20, 0
      %p40 = por %p38, %p39
      %p41 = scmp.ne.s32.totalorder %s30, %s33
      %p42 = scmp.eq.s32.totalorder %s25, 1
      %p43 = por %p41, %p42
      %p44 = scmp.ne.s32.totalorder %s33, %s34
      %p45 = scmp.eq.s32.totalorder %s25, 0
      %p46 = por %p44, %p45
      %p47 = scmp.ne.s32.totalorder %s33, %s34
      %p48 = scmp.eq.s32.totalorder %s26, 1
      %p49 = por %p47, %p48
      %p51 = scmp.ne.s32.totalorder %s34, %s50
      %p52 = scmp.eq.s32.totalorder %s26, 0
      %p53 = por %p51, %p52
      %s55 = sadd.s32 %s54, 1
      %p58 = scmp.eq.s32.totalorder %s20, 1
      %p59 = scmp.ne.s32.totalorder %s54, %s56
      %p60 = scmp.eq.s32.totalorder %s20, 0
      %p61 = por %p59, %p60
      %p62 = scmp.ne.s32.totalorder %s54, %s56
      %p63 = scmp.eq.s32.totalorder %s25, 1
      %p64 = por %p62, %p63
      %p65 = scmp.ne.s32.totalorder %s56, %s57
      %p66 = scmp.eq.s32.totalorder %s25, 0
      %p67 = por %p65, %p66
      %p68 = scmp.ne.s32.totalorder %s56, %s57
      %p69 = scmp.eq.s32.totalorder %s26, 1
      %p70 = por %p68, %p69
      %p72 = scmp.ne.s32.totalorder %s57, %s71
      %p73 = scmp.eq.s32.totalorder %s26, 0
      %p74 = por %p72, %p73
      %s76 = sadd.s32 %s75, 1
      %p79 = scmp.eq.s32.totalorder %s20, 1
      %p80 = scmp.ne.s32.totalorder %s75, %s77
      %p81 = scmp.eq.s32.totalorder %s20, 0
      %p82 = por %p80, %p81
      %p83 = scmp.ne.s32.totalorder %s75, %s77
      %p84 = scmp.eq.s32.totalorder %s25, 1
      %p85 = por %p83, %p84
      %p86 = scmp.ne.s32.totalorder %s77, %s78
      %p87 = scmp.eq.s32.totalorder %s25, 0
      %p88 = por %p86, %p87
      %p89 = scmp.ne.s32.totalorder %s77, %s78
      %p90 = scmp.eq.s32.totalorder %s26, 1
      %p91 = por %p89, %p90
      %p93 = scmp.ne.s32.totalorder %s78, %s92
      %p94 = scmp.eq.s32.totalorder %s26, 0
      %p95 = por %p93, %p94
      %s97 = sadd.s32 %s96, 1
      %p100 = scmp.eq.s32.totalorder %s20, 1
      %p101 = scmp.ne.s32.totalorder %s96, %s98
      %p102 = scmp.eq.s32.totalorder %s20, 0
      %p103 = por %p101, %p102
      %p104 = scmp.ne.s32.totalorder %s96, %s98
      %p105 = scmp.eq.s32.totalorder %s25, 1
      %p106 = por %p104, %p105
      %p107 = scmp.ne.s32.totalorder %s98, %s99
      %p108 = scmp.eq.s32.totalorder %s25, 0
      %p109 = por %p107, %p108
      %p110 = scmp.ne.s32.totalorder %s98, %s99
      %p111 = scmp.eq.s32.totalorder %s26, 1
      %p112 = por %p110, %p111
      %p114 = scmp.ne.s32.totalorder %s99, %s113
      %p115 = scmp.eq.s32.totalorder %s26, 0
      %p116 = por %p114, %p115
      %s118 = sadd.s32 %s117, 1
      %p121 = scmp.eq.s32.totalorder %s20, 1
      %p122 = scmp.ne.s32.totalorder %s117, %s119
      %p123 = scmp.eq.s32.totalorder %s20, 0
      %p124 = por %p122, %p123
      %p125 = scmp.ne.s32.totalorder %s117, %s119
      %p126 = scmp.eq.s32.totalorder %s25, 1
      %p127 = por %p125, %p126
      %p128 = scmp.ne.s32.totalorder %s119, %s120
      %p129 = scmp.eq.s32.totalorder %s25, 0
      %p130 = por %p128, %p129
      %p131 = scmp.ne.s32.totalorder %s119, %s120
      %p132 = scmp.eq.s32.totalorder %s26, 1
      %p133 = por %p131, %p132
      %p135 = scmp.ne.s32.totalorder %s120, %s134
      %p136 = scmp.eq.s32.totalorder %s26, 0
      %p137 = por %p135, %p136
      %s139 = sadd.s32 %s138, 1
      %p142 = scmp.eq.s32.totalorder %s20, 1
      %p143 = scmp.ne.s32.totalorder %s138, %s140
      %p144 = scmp.eq.s32.totalorder %s20, 0
      %p145 = por %p143, %p144
      %p146 = scmp.ne.s32.totalorder %s138, %s140
      %p147 = scmp.eq.s32.totalorder %s25, 1
      %p148 = por %p146, %p147
      %p149 = scmp.ne.s32.totalorder %s140, %s141
      %p150 = scmp.eq.s32.totalorder %s25, 0
      %p151 = por %p149, %p150
      %p152 = scmp.ne.s32.totalorder %s140, %s141
      %p153 = scmp.eq.s32.totalorder %s26, 1
      %p154 = por %p152, %p153
      %p156 = scmp.ne.s32.totalorder %s141, %s155
      %p157 = scmp.eq.s32.totalorder %s26, 0
      %p158 = por %p156, %p157
      %s160 = sadd.s32 %s159, 1
      %p163 = scmp.eq.s32.totalorder %s20, 1
      %p164 = scmp.ne.s32.totalorder %s159, %s161
      %p165 = scmp.eq.s32.totalorder %s20, 0
      %p166 = por %p164, %p165
      %p167 = scmp.ne.s32.totalorder %s159, %s161
      %p168 = scmp.eq.s32.totalorder %s25, 1
      %p169 = por %p167, %p168
      %p170 = scmp.ne.s32.totalorder %s161, %s162
      %p171 = scmp.eq.s32.totalorder %s25, 0
      %p172 = por %p170, %p171
      %p173 = scmp.ne.s32.totalorder %s161, %s162
      %p174 = scmp.eq.s32.totalorder %s26, 1
      %p175 = por %p173, %p174
      %p177 = scmp.ne.s32.totalorder %s162, %s176
      %p178 = scmp.eq.s32.totalorder %s26, 0
      %p179 = por %p177, %p178
      %s181 = sadd.s32 %s180, 1
      %p184 = scmp.eq.s32.totalorder %s20, 1
      %p185 = scmp.ne.s32.totalorder %s180, %s182
      %p186 = scmp.eq.s32.totalorder %s20, 0
      %p187 = por %p185, %p186
      %p188 = scmp.ne.s32.totalorder %s180, %s182
      %p189 = scmp.eq.s32.totalorder %s25, 1
      %p190 = por %p188, %p189
      %p191 = scmp.ne.s32.totalorder %s182, %s183
      %p192 = scmp.eq.s32.totalorder %s25, 0
      %p193 = por %p191, %p192
      %p194 = scmp.ne.s32.totalorder %s182, %s183
      %p195 = scmp.eq.s32.totalorder %s26, 1
      %p196 = por %p194, %p195
      %p198 = scmp.ne.s32.totalorder %s183, %s197
      %p199 = scmp.eq.s32.totalorder %s26, 0
      %p200 = por %p198, %p199
      %s202 = sadd.s32 %s201, 1
      %p205 = scmp.eq.s32.totalorder %s20, 1
      %p206 = scmp.ne.s32.totalorder %s201, %s203
      %p207 = scmp.eq.s32.totalorder %s20, 0
      %p208 = por %p206, %p207
      %p209 = scmp.ne.s32.totalorder %s201, %s203
      %p210 = scmp.eq.s32.totalorder %s25, 1
      %p211 = por %p209, %p210
      %p212 = scmp.ne.s32.totalorder %s203, %s204
      %p213 = scmp.eq.s32.totalorder %s25, 0
      %p214 = por %p212, %p213
      %p215 = scmp.ne.s32.totalorder %s203, %s204
      %p216 = scmp.eq.s32.totalorder %s26, 1
      %p217 = por %p215, %p216
      %p219 = scmp.ne.s32.totalorder %s204, %s218
      %p220 = scmp.eq.s32.totalorder %s26, 0
      %p221 = por %p219, %p220
      %s222 = ssub.s32 %s20, %s27
      %p223 = scmp.eq.s32.totalorder %s222, 0
      %s225 = sadd.s32 %s224, 1
      %s226 = scalar_select %p223, %s224, %s225
      %p229 = pneg %p223
      %p230 = scmp.eq.s32.totalorder %s20, 1
      %p231 = por %p229, %p230
      %p232 = scmp.ne.s32.totalorder %s224, %s227
      %p233 = scmp.eq.s32.totalorder %s20, 0
      %p234 = por %p232, %p233
      %p235 = scmp.ne.s32.totalorder %s224, %s227
      %p236 = scmp.eq.s32.totalorder %s25, 1
      %p237 = por %p235, %p236
      %p238 = scmp.ne.s32.totalorder %s227, %s228
      %p239 = scmp.eq.s32.totalorder %s25, 0
      %p240 = por %p238, %p239
      %p241 = scmp.ne.s32.totalorder %s227, %s228
      %p242 = scmp.eq.s32.totalorder %s26, 1
      %p243 = por %p241, %p242
      %p245 = scmp.ne.s32.totalorder %s228, %s244
      %p246 = scmp.eq.s32.totalorder %s26, 0
      %p247 = por %p245, %p246
      %p248 = scmp.le.s32.totalorder 1, %s20
      %p249 = scmp.lt.s32.totalorder %s20, 3
      %p250 = pnand %p248, %p249
      %p251 = pneg %p250
      // Predicated region
      $region9: #{tpu_custom_call.1} parent=5 // pred_check
        _
      $region10: #{tpu_custom_call.1} parent=5 // pred_check_branch
        %253 = sbr.rel (%p250) target = $region12
      $region11: #{tpu_custom_call.1} parent=5 // pred_region
        %s254 = ssub.s32 %s20, 1
        // Predicated region
        $region13: #{tpu_custom_call.1} parent=11 // pred_check
          %p255 = pneg %p67
        $region14: #{tpu_custom_call.1} parent=11 // pred_check_branch
          %257 = sbr.rel (%p255) target = $region16
        $region15: #{tpu_custom_call.1} parent=11 // pred_region
          _
        $region16: #{tpu_custom_call.1} parent=11 // pred_fallthru
          _
        // Predicated region
        $region17: #{tpu_custom_call.1} parent=11 // pred_check
          %p258 = pneg %p88
        $region18: #{tpu_custom_call.1} parent=11 // pred_check_branch
          %260 = sbr.rel (%p258) target = $region20
        $region19: #{tpu_custom_call.1} parent=11 // pred_region
          _
        $region20: #{tpu_custom_call.1} parent=11 // pred_fallthru
          _
        // Predicated region
        $region21: #{tpu_custom_call.1} parent=11 // pred_check
          %p261 = pneg %p109
        $region22: #{tpu_custom_call.1} parent=11 // pred_check_branch
          %263 = sbr.rel (%p261) target = $region24
        $region23: #{tpu_custom_call.1} parent=11 // pred_region
          _
        $region24: #{tpu_custom_call.1} parent=11 // pred_fallthru
          _
        // Predicated region
        $region25: #{tpu_custom_call.1} parent=11 // pred_check
          %p264 = pneg %p130
        $region26: #{tpu_custom_call.1} parent=11 // pred_check_branch
          %266 = sbr.rel (%p264) target = $region28
        $region27: #{tpu_custom_call.1} parent=11 // pred_region
          _
        $region28: #{tpu_custom_call.1} parent=11 // pred_fallthru
          _
        // Predicated region
        $region29: #{tpu_custom_call.1} parent=11 // pred_check
          %p267 = pneg %p151
        $region30: #{tpu_custom_call.1} parent=11 // pred_check_branch
          %269 = sbr.rel (%p267) target = $region32
        $region31: #{tpu_custom_call.1} parent=11 // pred_region
          _
        $region32: #{tpu_custom_call.1} parent=11 // pred_fallthru
          _
        // Predicated region
        $region33: #{tpu_custom_call.1} parent=11 // pred_check
          %p270 = pneg %p172
        $region34: #{tpu_custom_call.1} parent=11 // pred_check_branch
          %272 = sbr.rel (%p270) target = $region36
        $region35: #{tpu_custom_call.1} parent=11 // pred_region
          _
        $region36: #{tpu_custom_call.1} parent=11 // pred_fallthru
          _
        // Predicated region
        $region37: #{tpu_custom_call.1} parent=11 // pred_check
          %p273 = pneg %p193
        $region38: #{tpu_custom_call.1} parent=11 // pred_check_branch
          %275 = sbr.rel (%p273) target = $region40
        $region39: #{tpu_custom_call.1} parent=11 // pred_region
          _
        $region40: #{tpu_custom_call.1} parent=11 // pred_fallthru
          _
        // Predicated region
        $region41: #{tpu_custom_call.1} parent=11 // pred_check
          %p276 = pneg %p214
        $region42: #{tpu_custom_call.1} parent=11 // pred_check_branch
          %278 = sbr.rel (%p276) target = $region44
        $region43: #{tpu_custom_call.1} parent=11 // pred_region
          _
        $region44: #{tpu_custom_call.1} parent=11 // pred_fallthru
          _
      $region12: #{tpu_custom_call.1} parent=5 // pred_fallthru
        _
      %p279 = scmp.lt.s32.totalorder %s20, 2
      // Predicated region
      $region45: #{tpu_custom_call.1} parent=5 // pred_check
        %p280 = pneg %p279
      $region46: #{tpu_custom_call.1} parent=5 // pred_check_branch
        %282 = sbr.rel (%p280) target = $region48
      $region47: #{tpu_custom_call.1} parent=5 // pred_region
        // Predicated region
        $region49: #{tpu_custom_call.1} parent=47 // pred_check
          %p283 = pneg %p40
        $region50: #{tpu_custom_call.1} parent=47 // pred_check_branch
          %285 = sbr.rel (%p283) target = $region52
        $region51: #{tpu_custom_call.1} parent=47 // pred_region
          %p286 = scmp.lt.s32.totalorder %s20, 1
          %s287 = scalar_select %p286, %s20, 1
          %s288 = smul.addr %s287, 4
          %s289 = scalar_lea.vmem %s0, %s288
        $region52: #{tpu_custom_call.1} parent=47 // pred_fallthru
          _
      $region48: #{tpu_custom_call.1} parent=5 // pred_fallthru
        _
      %p290 = scmp.le.s32.totalorder 1, %s20
      %p291 = scmp.lt.s32.totalorder %s20, 3
      %p292 = pnand %p290, %p291
      %p293 = pneg %p292
      // Predicated region
      $region53: #{tpu_custom_call.1} parent=5 // pred_check
        _
      $region54: #{tpu_custom_call.1} parent=5 // pred_check_branch
        %295 = sbr.rel (%p292) target = $region56
      $region55: #{tpu_custom_call.1} parent=5 // pred_region
        %s296 = ssub.s32 %s20, 1
        %p297 = scmp.lt.s32.totalorder %s25, 1
        %s298 = scalar_select %p297, %s25, 1
        %s299 = smul.addr %s298, 4
        %s300 = scalar_lea.vmem %s0, %s299
        %p301 = pneg %p46
        %p302 = pneg %p43
        %p303 = pneg %p67
        %p304 = pneg %p64
        %p305 = pneg %p88
        %p306 = pneg %p85
        %p307 = pneg %p109
        %p308 = pneg %p106
        %p309 = pneg %p130
        %p310 = pneg %p127
        %p311 = pneg %p151
        %p312 = pneg %p148
        %p313 = pneg %p172
        %p314 = pneg %p169
        %p315 = pneg %p193
        %p316 = pneg %p190
        %p317 = pneg %p214
        %p318 = pneg %p211
        %p319 = pneg %p240
        %p320 = pneg %p237
        %s321 = sand.u32 %s227, 1
        %s322 = scalar_lea.sflag [#allocation4], %s321
        %s323 = sand.u32 %s227, 1
        %s324 = scalar_lea.vmem [#allocation3], %s323
        %p325 = scmp.lt.s32.totalorder %s25, 1
        %s326 = scalar_select %p325, %s25, 1
        %s327 = smul.addr %s326, 4
        %s328 = scalar_lea.vmem %s0, %s327
        %v329 = vld [vmem:[%s328] sm:$0x7]
        %v330 = vld [vmem:[%s1] sm:$0xff]
        %v331 = vld [vmem:[%s1 + $0x8] sm:$0xff]
        %v332 = vld [vmem:[%s1 + $0x10] sm:$0xff]
        %v333 = vld [vmem:[%s1 + $0x18] sm:$0xff]
        %v334 = vld [vmem:[%s2] sm:$0xff]
        %v335 = vld [vmem:[%s2 + $0x8] sm:$0xff]
        %v336 = vld [vmem:[%s2 + $0x10] sm:$0xff]
        %v337 = vld [vmem:[%s2 + $0x18] sm:$0xff]
        %339 = vset.pattern.permute.xlu0 0
        %340 = vperm.xlu0 %339, %v334
        %v341 = vpop.permute.xlu0 %340
        %344 = vset.pattern.permute.xlu0 0
        %345 = vperm.xlu0 %344, %v335
        %v346 = vpop.permute.xlu0 %345
        %349 = vset.pattern.permute.xlu0 0
        %350 = vperm.xlu0 %349, %v336
        %v351 = vpop.permute.xlu0 %350
        %354 = vset.pattern.permute.xlu0 0
        %355 = vperm.xlu0 %354, %v337
        %v356 = vpop.permute.xlu0 %355
        %vm358 = vcmask 23552
        %v360 = vsel %vm358, %v330, 0
        %v363 = vsel %vm358, %v331, 0
        %v366 = vsel %vm358, %v332, 0
        %v369 = vsel %vm358, %v333, 0
        %vm371 = vcmask 1042432
        %v373 = vsel %vm371, %v329, 0
        %375 = vmatpush.msra.mxu0 0.0
        %376 = vmatpush.msra.mxu0 0.0
        %377 = vmatpush.msra.mxu0 0.0
        %378 = vmatpush.msra.mxu0 0.0
        %379 = vmatpush.msra.mxu0 0.0
        %380 = vmatpush.msra.mxu0 0.0
        %381 = vmatpush.msra.mxu0 0.0
        %382 = vmatpush.msra.mxu0 0.0
        %383 = vmatpush.msra.mxu0 0.0
        %384 = vmatpush.msra.mxu0 0.0
        %385 = vmatpush.msra.mxu0 0.0
        %386 = vmatpush.msra.mxu0 0.0
        %387 = vmatpush.msra.mxu0 0.0
        %388 = vmatpush.msra.mxu0 0.0
        %389 = vmatpush.msra.mxu0 0.0
        %390 = vmatpush.msra.mxu0 %v373
        %391 = vmatmul.f32.gmra.mxu0 %v360
        %v392 = vpop.f32.mrf.mxu0
        %v393 = vadd.f32 %v341, %v392
        %394 = vmatmul.f32.gmra.mxu0 %v363
        %v395 = vpop.f32.mrf.mxu0
        %v396 = vadd.f32 %v346, %v395
        %397 = vmatmul.f32.gmra.mxu0 %v366
        %v398 = vpop.f32.mrf.mxu0
        %v399 = vadd.f32 %v351, %v398
        %400 = vmatmul.f32.gmra.mxu0 %v369
        %v401 = vpop.f32.mrf.mxu0
        %v402 = vadd.f32 %v356, %v401
        %403 = vdwg.mxu0
        %v404 = vand.u32 2147483647, %v393
        %v405 = vand.u32 2147483647, %v396
        %v406 = vand.u32 2147483647, %v399
        %v407 = vand.u32 2147483647, %v402
        %v408 = vmul.f32 %v404, -2.0
        %v409 = vmul.f32 %v405, -2.0
        %v410 = vmul.f32 %v406, -2.0
        %v411 = vmul.f32 %v407, -2.0
        %v412 = vmul.f32 %v408, 1.442695
        %v413 = vpow.pop %v412
        %v414 = vmul.f32 %v409, 1.442695
        %v415 = vpow.pop %v414
        %v416 = vmul.f32 %v410, 1.442695
        %v417 = vpow.pop %v416
        %v418 = vmul.f32 %v411, 1.442695
        %v419 = vpow.pop %v418
        %v420 = vadd.f32 %v413, 1.0
        %v421 = vlog2.pop %v420
        %v422 = vmul.f32 %v421, 0.6931472
        %v423 = vmul.f32 -0.5, %v413
        %v424 = vadd.f32 %v423, 1.0
        %v425 = vmul.f32 %v424, %v413
        %v426 = vand.u32 2147483647, %v413
        %vm427 = vcmp.lt.f32.partialorder %v426, 0.0004427343
        %v428 = vsel %vm427, %v425, %v422
        %v429 = vadd.f32 %v415, 1.0
        %v430 = vlog2.pop %v429
        %v431 = vmul.f32 %v430, 0.6931472
        %v432 = vmul.f32 -0.5, %v415
        %v433 = vadd.f32 %v432, 1.0
        %v434 = vmul.f32 %v433, %v415
        %v435 = vand.u32 2147483647, %v415
        %vm436 = vcmp.lt.f32.partialorder %v435, 0.0004427343
        %v437 = vsel %vm436, %v434, %v431
        %v438 = vadd.f32 %v417, 1.0
        %v439 = vlog2.pop %v438
        %v440 = vmul.f32 %v439, 0.6931472
        %v441 = vmul.f32 -0.5, %v417
        %v442 = vadd.f32 %v441, 1.0
        %v443 = vmul.f32 %v442, %v417
        %v444 = vand.u32 2147483647, %v417
        %vm445 = vcmp.lt.f32.partialorder %v444, 0.0004427343
        %v446 = vsel %vm445, %v443, %v440
        %v447 = vadd.f32 %v419, 1.0
        %v448 = vlog2.pop %v447
        %v449 = vmul.f32 %v448, 0.6931472
        %v450 = vmul.f32 -0.5, %v419
        %v451 = vadd.f32 %v450, 1.0
        %v452 = vmul.f32 %v451, %v419
        %v453 = vand.u32 2147483647, %v419
        %vm454 = vcmp.lt.f32.partialorder %v453, 0.0004427343
        %v455 = vsel %vm454, %v452, %v449
        %v456 = vadd.f32 %v404, %v428
        %v457 = vadd.f32 %v405, %v437
        %v458 = vadd.f32 %v406, %v446
        %v459 = vadd.f32 %v407, %v455
        %v460 = vld [vmem:[%s3] sm:$0xff]
        %v461 = vld [vmem:[%s3 + $0x8] sm:$0xff]
        %v462 = vld [vmem:[%s3 + $0x10] sm:$0xff]
        %v463 = vld [vmem:[%s3 + $0x18] sm:$0xff]
        %v464 = vld [vmem:[%s4] sm:$0xff]
        %v465 = vld [vmem:[%s4 + $0x8] sm:$0xff]
        %v466 = vld [vmem:[%s4 + $0x10] sm:$0xff]
        %v467 = vld [vmem:[%s4 + $0x18] sm:$0xff]
        %469 = vset.pattern.permute.xlu0 0
        %470 = vperm.xlu0 %469, %v464
        %v471 = vpop.permute.xlu0 %470
        %474 = vset.pattern.permute.xlu0 0
        %475 = vperm.xlu0 %474, %v465
        %v476 = vpop.permute.xlu0 %475
        %479 = vset.pattern.permute.xlu0 0
        %480 = vperm.xlu0 %479, %v466
        %v481 = vpop.permute.xlu0 %480
        %484 = vset.pattern.permute.xlu0 0
        %485 = vperm.xlu0 %484, %v467
        %v486 = vpop.permute.xlu0 %485
        %vm488 = vcmask 261120
        %v490 = vsel %vm488, %v460, 0
        %v493 = vsel %vm488, %v461, 0
        %v496 = vsel %vm488, %v462, 0
        %v499 = vsel %vm488, %v463, 0
        %501 = vmatpush.msra.mxu0 0.0
        %502 = vmatpush.msra.mxu0 0.0
        %503 = vmatpush.msra.mxu0 0.0
        %504 = vmatpush.msra.mxu0 0.0
        %505 = vmatpush.msra.mxu0 0.0
        %506 = vmatpush.msra.mxu0 0.0
        %507 = vmatpush.msra.mxu0 0.0
        %508 = vmatpush.msra.mxu0 0.0
        %509 = vmatpush.msra.mxu0 0.0
        %510 = vmatpush.msra.mxu0 0.0
        %511 = vmatpush.msra.mxu0 0.0
        %512 = vmatpush.msra.mxu0 0.0
        %513 = vmatpush.msra.mxu0 %v459
        %514 = vmatpush.msra.mxu0 %v458
        %515 = vmatpush.msra.mxu0 %v457
        %516 = vmatpush.msra.mxu0 %v456
        %517 = vmatmul.f32.gmra.mxu0 %v490
        %v518 = vpop.f32.mrf.mxu0
        %v519 = vadd.f32 %v471, %v518
        %520 = vmatmul.f32.gmra.mxu0 %v493
        %v521 = vpop.f32.mrf.mxu0
        %v522 = vadd.f32 %v476, %v521
        %523 = vmatmul.f32.gmra.mxu0 %v496
        %v524 = vpop.f32.mrf.mxu0
        %v525 = vadd.f32 %v481, %v524
        %526 = vmatmul.f32.gmra.mxu0 %v499
        %v527 = vpop.f32.mrf.mxu0
        %v528 = vadd.f32 %v486, %v527
        %529 = vdwg.mxu0
        %v530 = vand.u32 2147483647, %v519
        %v531 = vand.u32 2147483647, %v522
        %v532 = vand.u32 2147483647, %v525
        %v533 = vand.u32 2147483647, %v528
        %v534 = vmul.f32 %v530, -2.0
        %v535 = vmul.f32 %v531, -2.0
        %v536 = vmul.f32 %v532, -2.0
        %v537 = vmul.f32 %v533, -2.0
        %v538 = vmul.f32 %v534, 1.442695
        %v539 = vpow.pop %v538
        %v540 = vmul.f32 %v535, 1.442695
        %v541 = vpow.pop %v540
        %v542 = vmul.f32 %v536, 1.442695
        %v543 = vpow.pop %v542
        %v544 = vmul.f32 %v537, 1.442695
        %v545 = vpow.pop %v544
        %v546 = vadd.f32 %v539, 1.0
        %v547 = vlog2.pop %v546
        %v548 = vmul.f32 %v547, 0.6931472
        %v549 = vmul.f32 -0.5, %v539
        %v550 = vadd.f32 %v549, 1.0
        %v551 = vmul.f32 %v550, %v539
        %v552 = vand.u32 2147483647, %v539
        %vm553 = vcmp.lt.f32.partialorder %v552, 0.0004427343
        %v554 = vsel %vm553, %v551, %v548
        %v555 = vadd.f32 %v541, 1.0
        %v556 = vlog2.pop %v555
        %v557 = vmul.f32 %v556, 0.6931472
        %v558 = vmul.f32 -0.5, %v541
        %v559 = vadd.f32 %v558, 1.0
        %v560 = vmul.f32 %v559, %v541
        %v561 = vand.u32 2147483647, %v541
        %vm562 = vcmp.lt.f32.partialorder %v561, 0.0004427343
        %v563 = vsel %vm562, %v560, %v557
        %v564 = vadd.f32 %v543, 1.0
        %v565 = vlog2.pop %v564
        %v566 = vmul.f32 %v565, 0.6931472
        %v567 = vmul.f32 -0.5, %v543
        %v568 = vadd.f32 %v567, 1.0
        %v569 = vmul.f32 %v568, %v543
        %v570 = vand.u32 2147483647, %v543
        %vm571 = vcmp.lt.f32.partialorder %v570, 0.0004427343
        %v572 = vsel %vm571, %v569, %v566
        %v573 = vadd.f32 %v545, 1.0
        %v574 = vlog2.pop %v573
        %v575 = vmul.f32 %v574, 0.6931472
        %v576 = vmul.f32 -0.5, %v545
        %v577 = vadd.f32 %v576, 1.0
        %v578 = vmul.f32 %v577, %v545
        %v579 = vand.u32 2147483647, %v545
        %vm580 = vcmp.lt.f32.partialorder %v579, 0.0004427343
        %v581 = vsel %vm580, %v578, %v575
        %v582 = vadd.f32 %v530, %v554
        %v583 = vadd.f32 %v531, %v563
        %v584 = vadd.f32 %v532, %v572
        %v585 = vadd.f32 %v533, %v581
        %v586 = vmul.f32 %v582, 0.5
        %v587 = vmul.f32 %v583, 0.5
        %v588 = vmul.f32 %v584, 0.5
        %v589 = vmul.f32 %v585, 0.5
        %v590 = vadd.f32 %v456, %v586
        %v591 = vadd.f32 %v457, %v587
        %v592 = vadd.f32 %v458, %v588
        %v593 = vadd.f32 %v459, %v589
        %s594 = scalar_lea.vmem %s3, 32
        %v595 = vld [vmem:[%s594] sm:$0xff]
        %v596 = vld [vmem:[%s594 + $0x8] sm:$0xff]
        %v597 = vld [vmem:[%s594 + $0x10] sm:$0xff]
        %v598 = vld [vmem:[%s594 + $0x18] sm:$0xff]
        %s599 = scalar_lea.vmem %s4, 32
        %v600 = vld [vmem:[%s599] sm:$0xff]
        %v601 = vld [vmem:[%s599 + $0x8] sm:$0xff]
        %v602 = vld [vmem:[%s599 + $0x10] sm:$0xff]
        %v603 = vld [vmem:[%s599 + $0x18] sm:$0xff]
        %605 = vset.pattern.permute.xlu0 0
        %606 = vperm.xlu0 %605, %v600
        %v607 = vpop.permute.xlu0 %606
        %610 = vset.pattern.permute.xlu0 0
        %611 = vperm.xlu0 %610, %v601
        %v612 = vpop.permute.xlu0 %611
        %615 = vset.pattern.permute.xlu0 0
        %616 = vperm.xlu0 %615, %v602
        %v617 = vpop.permute.xlu0 %616
        %620 = vset.pattern.permute.xlu0 0
        %621 = vperm.xlu0 %620, %v603
        %v622 = vpop.permute.xlu0 %621
        %v625 = vsel %vm488, %v595, 0
        %v628 = vsel %vm488, %v596, 0
        %v631 = vsel %vm488, %v597, 0
        %v634 = vsel %vm488, %v598, 0
        %636 = vmatpush.msra.mxu0 0.0
        %637 = vmatpush.msra.mxu0 0.0
        %638 = vmatpush.msra.mxu0 0.0
        %639 = vmatpush.msra.mxu0 0.0
        %640 = vmatpush.msra.mxu0 0.0
        %641 = vmatpush.msra.mxu0 0.0
        %642 = vmatpush.msra.mxu0 0.0
        %643 = vmatpush.msra.mxu0 0.0
        %644 = vmatpush.msra.mxu0 0.0
        %645 = vmatpush.msra.mxu0 0.0
        %646 = vmatpush.msra.mxu0 0.0
        %647 = vmatpush.msra.mxu0 0.0
        %648 = vmatpush.msra.mxu0 %v593
        %649 = vmatpush.msra.mxu0 %v592
        %650 = vmatpush.msra.mxu0 %v591
        %651 = vmatpush.msra.mxu0 %v590
        %652 = vmatmul.f32.gmra.mxu0 %v625
        %v653 = vpop.f32.mrf.mxu0
        %v654 = vadd.f32 %v607, %v653
        %655 = vmatmul.f32.gmra.mxu0 %v628
        %v656 = vpop.f32.mrf.mxu0
        %v657 = vadd.f32 %v612, %v656
        %658 = vmatmul.f32.gmra.mxu0 %v631
        %v659 = vpop.f32.mrf.mxu0
        %v660 = vadd.f32 %v617, %v659
        %661 = vmatmul.f32.gmra.mxu0 %v634
        %v662 = vpop.f32.mrf.mxu0
        %v663 = vadd.f32 %v622, %v662
        %664 = vdwg.mxu0
        %v665 = vand.u32 2147483647, %v654
        %v666 = vand.u32 2147483647, %v657
        %v667 = vand.u32 2147483647, %v660
        %v668 = vand.u32 2147483647, %v663
        %v669 = vmul.f32 %v665, -2.0
        %v670 = vmul.f32 %v666, -2.0
        %v671 = vmul.f32 %v667, -2.0
        %v672 = vmul.f32 %v668, -2.0
        %v673 = vmul.f32 %v669, 1.442695
        %v674 = vpow.pop %v673
        %v675 = vmul.f32 %v670, 1.442695
        %v676 = vpow.pop %v675
        %v677 = vmul.f32 %v671, 1.442695
        %v678 = vpow.pop %v677
        %v679 = vmul.f32 %v672, 1.442695
        %v680 = vpow.pop %v679
        %v681 = vadd.f32 %v674, 1.0
        %v682 = vlog2.pop %v681
        %v683 = vmul.f32 %v682, 0.6931472
        %v684 = vmul.f32 -0.5, %v674
        %v685 = vadd.f32 %v684, 1.0
        %v686 = vmul.f32 %v685, %v674
        %v687 = vand.u32 2147483647, %v674
        %vm688 = vcmp.lt.f32.partialorder %v687, 0.0004427343
        %v689 = vsel %vm688, %v686, %v683
        %v690 = vadd.f32 %v676, 1.0
        %v691 = vlog2.pop %v690
        %v692 = vmul.f32 %v691, 0.6931472
        %v693 = vmul.f32 -0.5, %v676
        %v694 = vadd.f32 %v693, 1.0
        %v695 = vmul.f32 %v694, %v676
        %v696 = vand.u32 2147483647, %v676
        %vm697 = vcmp.lt.f32.partialorder %v696, 0.0004427343
        %v698 = vsel %vm697, %v695, %v692
        %v699 = vadd.f32 %v678, 1.0
        %v700 = vlog2.pop %v699
        %v701 = vmul.f32 %v700, 0.6931472
        %v702 = vmul.f32 -0.5, %v678
        %v703 = vadd.f32 %v702, 1.0
        %v704 = vmul.f32 %v703, %v678
        %v705 = vand.u32 2147483647, %v678
        %vm706 = vcmp.lt.f32.partialorder %v705, 0.0004427343
        %v707 = vsel %vm706, %v704, %v701
        %v708 = vadd.f32 %v680, 1.0
        %v709 = vlog2.pop %v708
        %v710 = vmul.f32 %v709, 0.6931472
        %v711 = vmul.f32 -0.5, %v680
        %v712 = vadd.f32 %v711, 1.0
        %v713 = vmul.f32 %v712, %v680
        %v714 = vand.u32 2147483647, %v680
        %vm715 = vcmp.lt.f32.partialorder %v714, 0.0004427343
        %v716 = vsel %vm715, %v713, %v710
        %v717 = vadd.f32 %v665, %v689
        %v718 = vadd.f32 %v666, %v698
        %v719 = vadd.f32 %v667, %v707
        %v720 = vadd.f32 %v668, %v716
        %v721 = vmul.f32 %v717, 0.5
        %v722 = vmul.f32 %v718, 0.5
        %v723 = vmul.f32 %v719, 0.5
        %v724 = vmul.f32 %v720, 0.5
        %v725 = vadd.f32 %v590, %v721
        %v726 = vadd.f32 %v591, %v722
        %v727 = vadd.f32 %v592, %v723
        %v728 = vadd.f32 %v593, %v724
        %v729 = vld [vmem:[%s5] sm:$0xff]
        %v730 = vld [vmem:[%s5 + $0x8] sm:$0xff]
        %v731 = vld [vmem:[%s5 + $0x10] sm:$0xff]
        %v732 = vld [vmem:[%s5 + $0x18] sm:$0xff]
        %734 = vset.pattern.permute.xlu0 0
        %735 = vperm.xlu0 %734, %v729
        %v736 = vpop.permute.xlu0 %735
        %739 = vset.pattern.permute.xlu0 0
        %740 = vperm.xlu0 %739, %v730
        %v741 = vpop.permute.xlu0 %740
        %744 = vset.pattern.permute.xlu0 0
        %745 = vperm.xlu0 %744, %v731
        %v746 = vpop.permute.xlu0 %745
        %749 = vset.pattern.permute.xlu0 0
        %750 = vperm.xlu0 %749, %v732
        %v751 = vpop.permute.xlu0 %750
        %v753 = vmul.f32 %v736, %v725
        %v754 = vmul.f32 %v741, %v726
        %v755 = vmul.f32 %v746, %v727
        %v756 = vmul.f32 %v751, %v728
        %v757 = vadd.f32 %v753, %v754
        %v758 = vadd.f32 %v757, %v755
        %v759 = vadd.f32 %v758, %v756
        %v760 = vrot.slane %v759, 4
        %v761 = vadd.f32 %v759, %v760
        %v762 = vrot.slane %v761, 2
        %v763 = vadd.f32 %v761, %v762
        %v764 = vrot.slane %v763, 1
        %v765 = vadd.f32 %v763, %v764
        %v766 = vld [vmem:[%s8] sm:$0x7]
        %v768 = vsel %vm358, %v766, 0
        %770 = vmatpush.msra.mxu0 0.0
        %771 = vmatpush.msra.mxu0 0.0
        %772 = vmatpush.msra.mxu0 0.0
        %773 = vmatpush.msra.mxu0 0.0
        %774 = vmatpush.msra.mxu0 0.0
        %775 = vmatpush.msra.mxu0 0.0
        %776 = vmatpush.msra.mxu0 0.0
        %777 = vmatpush.msra.mxu0 0.0
        %778 = vmatpush.msra.mxu0 0.0
        %779 = vmatpush.msra.mxu0 0.0
        %780 = vmatpush.msra.mxu0 0.0
        %781 = vmatpush.msra.mxu0 0.0
        %782 = vmatpush.msra.mxu0 0.0
        %783 = vmatpush.msra.mxu0 0.0
        %784 = vmatpush.msra.mxu0 0.0
        %785 = vmatpush.msra.mxu0 %v373
        %786 = vmatmul.f32.gmra.mxu0 %v768
        %v787 = vpop.f32.mrf.mxu0
        %v788 = vadd.f32 0.0, %v787
        %789 = vdwg.mxu0
        %v790 = vmul.f32 %v788, %v329
        %v791 = vsel %vm371, %v790, 0.0
        %v792 = vrot.slane %v791, 4
        %v793 = vadd.f32 %v791, %v792
        %v794 = vrot.slane %v793, 2
        %v795 = vadd.f32 %v793, %v794
        %v796 = vrot.slane %v795, 1
        %v797 = vadd.f32 %v795, %v796
        %v798 = vmul.f32 %v797, 0.5
        %v799 = vld [vmem:[%s6] sm:$0x7]
        %801 = vset.pattern.permute.xlu0 0
        %802 = vperm.xlu0 %801, %v799
        %v803 = vpop.permute.xlu0 %802
        %v805 = vmul.f32 %v803, %v329
        %v806 = vsel %vm371, %v805, 0.0
        %v807 = vrot.slane %v806, 4
        %v808 = vadd.f32 %v806, %v807
        %v809 = vrot.slane %v808, 2
        %v810 = vadd.f32 %v808, %v809
        %v811 = vrot.slane %v810, 1
        %v812 = vadd.f32 %v810, %v811
        %v813 = vld [vmem:[#allocation2] sm:$0x1]
        %815 = vset.pattern.permute.xlu0 0
        %816 = vperm.xlu0 %815, %v813
        %v817 = vpop.permute.xlu0 %816
        %v819 = vperm.slane %v817, 0
        %v820 = vadd.f32 %v812, %v819
        %v821 = vadd.f32 %v765, %v798
        %v822 = vadd.f32 %v821, %v820
        %823 = vst [vmem:[%s324] sm:$0x1] %v822
        %s824 = sand.u32 %s227, 1
        %s825 = scalar_lea.sflag [#allocation4], %s824
        %s826 = sand.u32 %s227, 1
        %s827 = scalar_lea.vmem [#allocation3], %s826
        // Predicated region
        $region57: #{tpu_custom_call.1} parent=55 // pred_check
          %p828 = pneg %p237
        $region58: #{tpu_custom_call.1} parent=55 // pred_check_branch
          %830 = sbr.rel (%p828) target = $region60
        $region59: #{tpu_custom_call.1} parent=55 // pred_region
          %832 = vsyncadd %s825, 0
          %s833 = scalar_lea.hbm %s9, %s25
          %s835 = sshll.u32 %s827, 4
          %s836 = int_to_ptr.vmem [resolvable:$true] %s835
          %s837 = sshll.u32 %s833, 4
          %s838 = int_to_ptr.hbm [resolvable:$true] %s837
          %840 = dma.vmem_to_hbm [thread:$0]  %s836, 16, %s838, %s825
        $region60: #{tpu_custom_call.1} parent=55 // pred_fallthru
          _
      $region56: #{tpu_custom_call.1} parent=5 // pred_fallthru
        _
      %p841 = scmp.le.s32.totalorder 2, %s20
      // Predicated region
      $region61: #{tpu_custom_call.1} parent=5 // pred_check
        %p842 = pneg %p841
      $region62: #{tpu_custom_call.1} parent=5 // pred_check_branch
        %844 = sbr.rel (%p842) target = $region64
      $region63: #{tpu_custom_call.1} parent=5 // pred_region
        %s845 = ssub.s32 %s20, 2
        // Predicated region
        $region65: #{tpu_custom_call.1} parent=63 // pred_check
          %p846 = pneg %p243
        $region66: #{tpu_custom_call.1} parent=63 // pred_check_branch
          %848 = sbr.rel (%p846) target = $region68
        $region67: #{tpu_custom_call.1} parent=63 // pred_region
          %s849 = sand.u32 %s228, 1
          %s850 = scalar_lea.sflag [#allocation4], %s849
          %s851 = sand.u32 %s228, 1
          %s852 = scalar_lea.vmem [#allocation3], %s851
          %854 = dma.done %s850, 16
        $region68: #{tpu_custom_call.1} parent=63 // pred_fallthru
          _
      $region64: #{tpu_custom_call.1} parent=5 // pred_fallthru
        _
    $region6: #{tpu_custom_call.1} parent=1 // loop_footer
      %s24 = sadd.s32 1, %s20
    $region7: #{tpu_custom_call.1} parent=1 // loop_footer_branch
      %19 = sbr.rel target = $region3
    $region8: #{tpu_custom_call.1} parent=1 // loop_exit
      _
    %855 = vsyncpa [#allocation4], 1
    %s856 = scalar_lea.sflag [#allocation4], 1
    %857 = vsyncpa %s856, 1

</llo_original>
